<compile_context>
chip_gen: v7x
topology: tpu7x:2x2x1
jax: 0.10.0
libtpu: 0.0.40
codegen_flags: <defaults>
</compile_context>

<pallas_src>
import jax
import jax.numpy as jnp
from jax.experimental import pallas as pl
from jax.experimental.pallas import tpu as pltpu


def _weight_cell_kernel(w_ref, o_ref):
    # forward(x) = W : copy the (1, num_models) parameter to the output.
    # No alias on the output buffer, so this single vst is required and is
    # the entire body.
    o_ref[...] = w_ref[...]


def weight_cell_pallas(W):
    """Parity-only Pallas implementation of WEIGHTCell.forward (identity on W).

    Gridless single invocation; whole array as one VMEM block; no
    input/output aliasing (W may be a live, reused training parameter).
    """
    return pl.pallas_call(
        _weight_cell_kernel,
        out_shape=jax.ShapeDtypeStruct(W.shape, W.dtype),
        in_specs=[pl.BlockSpec(memory_space=pltpu.MemorySpace.VMEM)],
        out_specs=pl.BlockSpec(memory_space=pltpu.MemorySpace.VMEM),
    )(W)


def weight_cell_forward(x, W, *, use_pallas=False):
    """WEIGHTCell.forward.

    Args:
      x: jnp.ndarray, any input (ignored, exactly like the PyTorch module).
         It is never passed to any kernel, so it costs nothing.
      W: jnp.ndarray of shape (1, num_models), float32.
      use_pallas: if True, route through the parity Pallas kernel; the
        default (False) is the recommended zero-overhead path: return W.

    Returns:
      jnp.ndarray of shape (1, num_models) equal to W.
    """
    del x  # unused, matching `forward(self, x): return self.W`
    if use_pallas:
        return weight_cell_pallas(W)
    # Fast path (recommended by the perf review): forward is an identity on
    # the parameter, so just return it — zero launch overhead on every TPU
    # generation.
    return W


def init_weight_cell_params(index: int, num_models: int):
    """Deterministic parameter init matching torch.nn.init.ones_(self.W)."""
    del index  # unused, kept for signature parity with the PyTorch module
    return jnp.ones((1, num_models), dtype=jnp.float32)


if __name__ == "__main__":
    index = 0
    num_models = 4
    batch, feat = 2, 16

    # Deterministic example input (ignored by forward, matching PyTorch).
    key = jax.random.PRNGKey(0)
    x = jax.random.normal(key, (batch, feat), dtype=jnp.float32)

    W = init_weight_cell_params(index, num_models)

    # Run the Pallas parity kernel once (exercise the pallas_call path).
    out_pallas = weight_cell_forward(x, W, use_pallas=True)
    out_pallas = jax.block_until_ready(out_pallas)

    # Also exercise the recommended zero-overhead path.
    out_fast = weight_cell_forward(x, W)
    out_fast = jax.block_until_ready(out_fast)

    # Reference check: forward just returns W (ones of shape (1, num_models)).
    expected = jnp.ones((1, num_models), dtype=jnp.float32)
    for out in (out_pallas, out_fast):
        assert out.shape == (1, num_models), out.shape
        assert out.dtype == jnp.float32, out.dtype
        assert bool(jnp.all(out == expected)), "output mismatch vs reference"

    print("KERNEL_OK")
</pallas_src>

<mosaic_0001>
module attributes {stable_mosaic.version = 11 : i64} {
  func.func @_weight_cell_kernel(%arg0: memref<1x4xf32, #tpu.memory_space<vmem>>, %arg1: memref<1x4xf32, #tpu.memory_space<vmem>>) attributes {dimension_semantics = [], scalar_prefetch = 0 : i64, scratch_operands = 0 : i64, tpu.core_type = #tpu.core_type<tc>} {
    %c0 = arith.constant 0 : index
    %c0_0 = arith.constant 0 : index
    %0 = vector.load %arg0[%c0, %c0_0] : memref<1x4xf32, #tpu.memory_space<vmem>>, vector<1x4xf32>
    %c0_1 = arith.constant 0 : index
    %c0_2 = arith.constant 0 : index
    %1 = vector.load %arg1[%c0_1, %c0_2] : memref<1x4xf32, #tpu.memory_space<vmem>>, vector<1x4xf32>
    tpu.vector_store %arg1[%c0_1, %c0_2], %0 {strides = array<i32>} : memref<1x4xf32, #tpu.memory_space<vmem>>, vector<1x4xf32>,
    return
  }
}

</mosaic_0001>

<llo_original>
// kernel: tpu_custom_call.1
$region0: #{tpu_custom_call.1}
  #allocation0 [shape = 'u32[]', space=smem, size = 0x4, offset = 0x4, fixed_abs, tag = 'smem constant byte address 0x4 - core index']
  #allocation1 [shape = 'u32[144,128]{1,0:T(1,128)}', space=vmem, size = 0x12000, scoped, tag = 'internal scratch']
  %s0 = inlined_call_operand.hbm [shape: f32[1,4], index: 0, kind: input, shape index: {}]
  %s1 = inlined_call_operand.hbm [shape: f32[1,4], index: 1, kind: output, shape index: {}]
  %s2 = sld [smem:[#allocation0]]
  $region18: #{tpu_custom_call.1} parent=0
    _
  %s4 = ssub.s32 1, %s2
  %s5 = scalar_select 0, %s4, %s2
  $region1: #{tpu_custom_call.1} parent=0
    #allocation2 [shape = 'u8[512]{0}', space=vmem, size = 0x400, scoped, tag = 'input window, operand 0, single buffered']
    #allocation3 [shape = 's32[1]{0}', space=sflag, size = 0x4, scoped, tag = 'scoped memory for tpu_custom_call.1']
    #allocation4 [shape = 's32[1]{0}', space=sflag, size = 0x4, scoped, tag = 'scoped memory for tpu_custom_call.1']
    #allocation5 [shape = 'u8[512]{0}', space=vmem, size = 0x400, scoped, tag = 'output window, operand 0, single buffered']
    %6 = vsyncpa [#allocation3], 0
    %7 = vsyncpa [#allocation4], 0
    // Predicated region
    $region2: #{tpu_custom_call.1} parent=1 // pred_check
      _
    $region3: #{tpu_custom_call.1} parent=1 // pred_check_branch
      %9 = sbr.rel (0) target = $region5
    $region4: #{tpu_custom_call.1} parent=1 // pred_region
      %s11 = ssub.s32 16, 16
      %12 = vsyncadd [#allocation3], %s11
      %s14 = sshll.u32 [#allocation2], 4
      %s15 = int_to_ptr.vmem [resolvable:$true] %s14
      %17 = dma.hbm_to_vmem [thread:$0]  %s0, 16, %s15, [#allocation3]
    $region5: #{tpu_custom_call.1} parent=1 // pred_fallthru
      _
    // Predicated region
    $region6: #{tpu_custom_call.1} parent=1 // pred_check
      _
    $region7: #{tpu_custom_call.1} parent=1 // pred_check_branch
      %19 = sbr.rel (0) target = $region9
    $region8: #{tpu_custom_call.1} parent=1 // pred_region
      %20 = dma.done [#allocation3], 16
    $region9: #{tpu_custom_call.1} parent=1 // pred_fallthru
      _
    %v21 = vld [vmem:[#allocation2] sm:$0x1]
    %vm22 = vcmask 24576
    %23 = vst.msk [vmem:[#allocation5] sm:$0x1] %vm22, %v21
    // Predicated region
    $region10: #{tpu_custom_call.1} parent=1 // pred_check
      _
    $region11: #{tpu_custom_call.1} parent=1 // pred_check_branch
      %25 = sbr.rel (0) target = $region13
    $region12: #{tpu_custom_call.1} parent=1 // pred_region
      %s27 = ssub.s32 16, 16
      %28 = vsyncadd [#allocation4], %s27
      %s30 = sshll.u32 [#allocation5], 4
      %s31 = int_to_ptr.vmem [resolvable:$true] %s30
      %33 = dma.vmem_to_hbm [thread:$0]  %s31, 16, %s1, [#allocation4]
    $region13: #{tpu_custom_call.1} parent=1 // pred_fallthru
      _
    // Predicated region
    $region14: #{tpu_custom_call.1} parent=1 // pred_check
      _
    $region15: #{tpu_custom_call.1} parent=1 // pred_check_branch
      %35 = sbr.rel (0) target = $region17
    $region16: #{tpu_custom_call.1} parent=1 // pred_region
      %36 = dma.done [#allocation4], 16
    $region17: #{tpu_custom_call.1} parent=1 // pred_fallthru
      _
    %37 = vsyncpa [#allocation3], 1
    %38 = vsyncpa [#allocation4], 1

</llo_original>
